<compile_context>
chip_gen: v6e
topology: v6e:2x2x1
jax: 0.10.0
libtpu: 0.0.40
codegen_flags: <defaults>
</compile_context>

<pallas_src>
import math

import jax
import jax.numpy as jnp
from jax.experimental import pallas as pl
from jax.experimental.pallas import tpu as pltpu

_LANES = 128
_SUBLANES = 8
_MAX_COL_TILE = 2048          # lane-dim tile when a single row is too wide for VMEM
_SPLIT_BYTES = 2 << 20        # force >=2 row tiles above this (megacore / pipelining)


def _mul_kernel(x_ref, p_ref, o_ref):
    # x_ref: (tb, tc) streamed tile; p_ref: (1|tb, tc) VMEM-resident param tile.
    # Pure VPU broadcasted multiply.
    o_ref[...] = x_ref[...] * p_ref[...]


def _cdiv(a: int, b: int) -> int:
    return -(-a // b)


def _round_down(v: int, m: int) -> int:
    return max(m, (v // m) * m)


def _round_up(v: int, m: int) -> int:
    return _cdiv(v, m) * m


def _per_buffer_budget_bytes() -> int:
    """Target bytes for one streamed (tb, tc) buffer, per chip generation."""
    try:
        kind = jax.devices()[0].device_kind.lower()
    except Exception:  # pragma: no cover
        kind = ""
    if "v6" in kind:      # 128 MiB physical VMEM + highest single-core HBM BW
        return 10 << 20
    return 6 << 20        # v5e (with explicit vmem limit) and v7x (64 MiB VMEM)


def _pallas_broadcast_mul(x_flat, p2d, tb, tc, vmem_limit, donate_x):
    rows, cols = x_flat.shape
    p_rows = p2d.shape[0]
    grid_spec = pl.GridSpec(
        grid=(_cdiv(rows, tb), _cdiv(cols, tc)),
        in_specs=[
            pl.BlockSpec((tb, tc), lambda i, j: (i, j)),       # streamed x tiles
            pl.BlockSpec((p_rows, tc), lambda i, j: (0, j)),   # resident param slab
        ],
        out_specs=pl.BlockSpec((tb, tc), lambda i, j: (i, j)),
    )
    return pl.pallas_call(
        _mul_kernel,
        out_shape=jax.ShapeDtypeStruct((rows, cols), x_flat.dtype),
        grid_spec=grid_spec,
        compiler_params=pltpu.CompilerParams(
            # Both axes independent -> shard across both TensorCores on v7x.
            dimension_semantics=("parallel", "parallel"),
            vmem_limit_bytes=vmem_limit,
        ),
        input_output_aliases=({0: 0} if donate_x else {}),
    )(x_flat, p2d)


def test_module_forward(x: jax.Array, param: jax.Array, *,
                        min_pallas_bytes: int = 256 * 1024,
                        donate_x: bool = False) -> jax.Array:
    """Pallas equivalent of TestModule.forward: x * param (broadcast on last dim)."""
    orig_shape = x.shape
    H = param.shape[-1]
    assert orig_shape[-1] == H, "last dim of x must match param size"
    if param.dtype != x.dtype:
        param = param.astype(x.dtype)

    itemsize = jnp.dtype(x.dtype).itemsize
    total_bytes = int(x.size) * itemsize
    if total_bytes < min_pallas_bytes:
        # Kernel-launch + per-step pipeline overhead dominates tiny arrays;
        # a fused XLA elementwise multiply is strictly faster there.
        return x * param

    B = int(math.prod(orig_shape[:-1])) if len(orig_shape) > 1 else 1
    x2d = x.reshape(B, H)

    # ---- choose a lane-dense layout ---------------------------------------
    period = 1
    if H % _LANES == 0:
        rows, cols = B, H
        repacked = False
    elif (B * H) % _LANES == 0 and (H // math.gcd(H, _LANES)) <= _LANES:
        # Fold (B, H) into 128-wide rows so stores are full unmasked `vst`.
        # The broadcast pattern of `param` over those rows repeats every
        # `period` rows; a tiny (period, 128) slab reproduces it exactly.
        period = H // math.gcd(H, _LANES)
        rows, cols = (B * H) // _LANES, _LANES
        repacked = True
        # TODO(synk): confirm this reshape stays a free HBM view (no XLA relayout
        # pass) for exotic input layouts; row-major activations are free.
    else:
        rows, cols = B, H          # rare awkward shapes: masked stores, still correct
        repacked = False

    # ---- tile sizing --------------------------------------------------------
    budget = _per_buffer_budget_bytes()

    if cols * _SUBLANES * itemsize > budget:
        tc = _MAX_COL_TILE         # lane-dim tiling bounds VMEM for very large H
    else:
        tc = cols

    row_align = _SUBLANES * period // math.gcd(_SUBLANES, period)   # lcm(8, period)
    tb = _round_down(budget // (tc * itemsize), row_align)
    if tb >= rows:
        tb = rows                  # full-extent block (exempt from (8,128) rule)

    grid_r, grid_c = _cdiv(rows, tb), _cdiv(cols, tc)
    if (grid_r == 1 and grid_c == 1 and total_bytes > _SPLIT_BYTES
            and rows >= 2 * row_align):
        # >= 2 grid steps keeps both v7x TensorCores busy and enables
        # DMA/compute overlap on single-core chips.
        tb = _round_up(_cdiv(rows, 2), row_align)

    # ---- build the param slab ----------------------------------------------
    if repacked:
        slab = jnp.tile(param, (period * _LANES) // H).reshape(period, _LANES)
        p2d = slab if period == 1 else jnp.tile(slab, (tb // period, 1))
        x_flat = x2d.reshape(rows, _LANES)
    else:
        p2d = param.reshape(1, H)
        x_flat = x2d

    # Covers 2x(x) + 2x(out) double buffers plus the resident param slab with
    # headroom; always below physical VMEM on v5e/v6e (128 MiB) and v7x (64 MiB).
    vmem_limit = budget * 6 + (8 << 20)

    out_flat = _pallas_broadcast_mul(x_flat, p2d, tb, tc, vmem_limit, donate_x)
    return out_flat.reshape(orig_shape)


if __name__ == "__main__":
    key = jax.random.PRNGKey(0)
    kx, kp, kx2, kp2, kx3, kp3 = jax.random.split(key, 6)

    # Shapes consistent with TestModule(input_size=32) applied to a small batch.
    input_size = 32
    batch = 8
    x = jax.random.normal(kx, (batch, input_size), dtype=jnp.float32)
    param = jax.random.normal(kp, (input_size,), dtype=jnp.float32)

    out = test_module_forward(x, param, min_pallas_bytes=0)   # force the Pallas path
    jax.block_until_ready(out)
    ref = x * param
    assert out.shape == ref.shape
    assert jnp.allclose(out, ref, atol=1e-6, rtol=1e-6)

    # Extra coverage: H that does not divide 128 (period-3 lane-dense repack).
    x2 = jax.random.normal(kx2, (16, 96), dtype=jnp.float32)
    p2 = jax.random.normal(kp2, (96,), dtype=jnp.float32)
    out2 = test_module_forward(x2, p2, min_pallas_bytes=0)
    assert jnp.allclose(out2, x2 * p2, atol=1e-6, rtol=1e-6)

    # Extra coverage: lane-aligned H (no repack, (1, H) broadcast row).
    x3 = jax.random.normal(kx3, (64, 256), dtype=jnp.float32)
    p3 = jax.random.normal(kp3, (256,), dtype=jnp.float32)
    out3 = test_module_forward(x3, p3, min_pallas_bytes=0)
    jax.block_until_ready(out3)
    assert jnp.allclose(out3, x3 * p3, atol=1e-6, rtol=1e-6)

    print("KERNEL_OK")
</pallas_src>

<mosaic_0001>
module attributes {stable_mosaic.version = 11 : i64} {
  func.func @_mul_kernel(%arg0: i32, %arg1: i32, %arg2: memref<2x128xf32, #tpu.memory_space<vmem>>, %arg3: memref<1x128xf32, #tpu.memory_space<vmem>>, %arg4: memref<2x128xf32, #tpu.memory_space<vmem>>) attributes {dimension_semantics = [#tpu.dimension_semantics<parallel>, #tpu.dimension_semantics<parallel>], iteration_bounds = array<i64: 1, 1>, scalar_prefetch = 0 : i64, scratch_operands = 0 : i64, tpu.core_type = #tpu.core_type<tc>, window_params = [{transform_indices = @transform_0, window_bounds = array<i64: 2, 128>}, {transform_indices = @transform_1, window_bounds = array<i64: 1, 128>}, {transform_indices = @transform_2, window_bounds = array<i64: 2, 128>}]} {
    %c0 = arith.constant 0 : index
    %c0_0 = arith.constant 0 : index
    %0 = vector.load %arg2[%c0, %c0_0] : memref<2x128xf32, #tpu.memory_space<vmem>>, vector<2x128xf32>
    %c0_1 = arith.constant 0 : index
    %c0_2 = arith.constant 0 : index
    %1 = vector.load %arg3[%c0_1, %c0_2] : memref<1x128xf32, #tpu.memory_space<vmem>>, vector<1x128xf32>
    %2 = vector.broadcast %1 : vector<1x128xf32> to vector<2x128xf32>
    %3 = arith.mulf %0, %2 : vector<2x128xf32>
    %c0_3 = arith.constant 0 : index
    %c0_4 = arith.constant 0 : index
    %4 = vector.load %arg4[%c0_3, %c0_4] : memref<2x128xf32, #tpu.memory_space<vmem>>, vector<2x128xf32>
    tpu.vector_store %arg4[%c0_3, %c0_4], %3 {strides = array<i32>} : memref<2x128xf32, #tpu.memory_space<vmem>>, vector<2x128xf32>,
    return
  }
  func.func @transform_0(%arg0: i32, %arg1: i32) -> (i32, i32) {
    %c0_i32 = arith.constant 0 : i32
    return %arg0, %arg1 : i32, i32
  }
  func.func @transform_1(%arg0: i32, %arg1: i32) -> (i32, i32) {
    %c0_i32 = arith.constant 0 : i32
    %c0_i32_0 = arith.constant 0 : i32
    return %c0_i32, %arg1 : i32, i32
  }
  func.func @transform_2(%arg0: i32, %arg1: i32) -> (i32, i32) {
    %c0_i32 = arith.constant 0 : i32
    return %arg0, %arg1 : i32, i32
  }
}

</mosaic_0001>

<llo_original>
// kernel: tpu_custom_call.1
$region0: #{tpu_custom_call.1}
  #allocation0 [shape = 'u32[]', space=smem, size = 0x4, offset = 0x4, fixed_abs, tag = 'smem constant byte address 0x4 - core index']
  #allocation1 [shape = 'u32[144,128]{1,0:T(1,128)}', space=vmem, size = 0x12000, scoped, tag = 'internal scratch']
  %s0 = inlined_call_operand.hbm [shape: f32[2,128], index: 0, kind: input, shape index: {}]
  %s1 = inlined_call_operand.vmem [shape: f32[1,128], index: 1, kind: input, shape index: {}]
  %s2 = inlined_call_operand.hbm [shape: f32[2,128], index: 2, kind: output, shape index: {}]
  %s3 = sld [smem:[#allocation0]]
  $region22: #{tpu_custom_call.1} parent=0
    _
  %s5 = ssub.s32 1, %s3
  %s6 = scalar_select 0, %s5, %s3
  $region1: #{tpu_custom_call.1} parent=0
    #allocation2 [shape = 'u8[1024]{0}', space=vmem, size = 0x400, scoped, tag = 'input window, operand 0, single buffered']
    #allocation3 [shape = 's32[1]{0}', space=sflag, size = 0x4, scoped, tag = 'scoped memory for tpu_custom_call.1']
    #allocation4 [shape = 's32[1]{0}', space=sflag, size = 0x4, scoped, tag = 'scoped memory for tpu_custom_call.1']
    #allocation5 [shape = 'u8[1024]{0}', space=vmem, size = 0x400, scoped, tag = 'output window, operand 0, single buffered']
    %7 = vsyncpa [#allocation3], 0
    %8 = vsyncpa [#allocation4], 0
    // Predicated region
    $region2: #{tpu_custom_call.1} parent=1 // pred_check
      _
    $region3: #{tpu_custom_call.1} parent=1 // pred_check_branch
      %10 = sbr.rel (0) target = $region5
    $region4: #{tpu_custom_call.1} parent=1 // pred_region
      %s12 = ssub.s32 32, 32
      %13 = vsyncadd [#allocation3], %s12
      %s15 = sshll.u32 [#allocation2], 4
      %s16 = int_to_ptr.vmem [resolvable:$true] %s15
      %18 = dma.hbm_to_vmem [thread:$0]  %s0, 32, %s16, [#allocation3]
    $region5: #{tpu_custom_call.1} parent=1 // pred_fallthru
      _
    // Predicated region
    $region6: #{tpu_custom_call.1} parent=1 // pred_check
      _
    $region7: #{tpu_custom_call.1} parent=1 // pred_check_branch
      %20 = sbr.rel (0) target = $region9
    $region8: #{tpu_custom_call.1} parent=1 // pred_region
      _
    $region9: #{tpu_custom_call.1} parent=1 // pred_fallthru
      _
    // Predicated region
    $region10: #{tpu_custom_call.1} parent=1 // pred_check
      _
    $region11: #{tpu_custom_call.1} parent=1 // pred_check_branch
      %22 = sbr.rel (0) target = $region13
    $region12: #{tpu_custom_call.1} parent=1 // pred_region
      %23 = dma.done [#allocation3], 32
    $region13: #{tpu_custom_call.1} parent=1 // pred_fallthru
      _
    %v24 = vld [vmem:[#allocation2] sm:$0x3]
    %v25 = vld [vmem:[%s1] sm:$0x1]
    %v27 = vlaneseq
    %v28 = vshrl.u32 %v27, 7
    %v29 = vsub.s32 0, %v28
    %v30 = vrot.slane %v25, %v29
    %v32 = vmul.f32 %v24, %v30
    %33 = vst [vmem:[#allocation5] sm:$0x3] %v32
    // Predicated region
    $region14: #{tpu_custom_call.1} parent=1 // pred_check
      _
    $region15: #{tpu_custom_call.1} parent=1 // pred_check_branch
      %35 = sbr.rel (0) target = $region17
    $region16: #{tpu_custom_call.1} parent=1 // pred_region
      %s37 = ssub.s32 32, 32
      %38 = vsyncadd [#allocation4], %s37
      %s40 = sshll.u32 [#allocation5], 4
      %s41 = int_to_ptr.vmem [resolvable:$true] %s40
      %43 = dma.vmem_to_hbm [thread:$0]  %s41, 32, %s2, [#allocation4]
    $region17: #{tpu_custom_call.1} parent=1 // pred_fallthru
      _
    // Predicated region
    $region18: #{tpu_custom_call.1} parent=1 // pred_check
      _
    $region19: #{tpu_custom_call.1} parent=1 // pred_check_branch
      %45 = sbr.rel (0) target = $region21
    $region20: #{tpu_custom_call.1} parent=1 // pred_region
      %46 = dma.done [#allocation4], 32
    $region21: #{tpu_custom_call.1} parent=1 // pred_fallthru
      _
    %47 = vsyncpa [#allocation3], 1
    %48 = vsyncpa [#allocation4], 1

</llo_original>
